<compile_context>
chip_gen: v7x
topology: tpu7x:2x2x1
jax: 0.10.0
libtpu: 0.0.40
codegen_flags: <defaults>
</compile_context>

<pallas_src>
import jax
import jax.numpy as jnp
import numpy as np
from jax.experimental import pallas as pl


def relu_conv1x1_bn_kernel(x_ref, w_ref, gb_ref, o_ref):
    """Fused ReLUConvBN (1x1 conv, stride 1, no bias) + training-mode BatchNorm.

    x_ref : (N, C_in,  HW)  activations, HW = H*W on the 128-lane axis
    w_ref : (C_out, C_in)   1x1 conv weight (PyTorch (C_out, C_in, 1, 1) squeezed)
    gb_ref: (C_out, 2)      column 0 = BatchNorm gamma, column 1 = beta
    o_ref : (N, C_out, HW)  output (same layout as input)
    """
    x = jnp.maximum(x_ref[...], 0.0)                       # ReLU (VPU)
    w = w_ref[...]                                         # (C_out, C_in)
    n, c_in, _hw = x.shape

    # 1x1 conv as C_in (=4) statically-unrolled broadcast FMAs on the VPU.
    # y[n, o, p] = sum_i w[o, i] * x[n, i, p]
    y = w[None, :, 0:1] * x[:, 0:1, :]                     # (N, C_out, HW), f32
    for i in range(1, c_in):
        y = y + w[None, :, i:i + 1] * x[:, i:i + 1, :]

    # One-pass BatchNorm2d with batch statistics (PyTorch module default = train
    # mode) and folded affine.  Lane reductions (XLU) first, then fold the tiny
    # batch axis with unrolled adds (N is a static trace-time constant).
    s_b = jnp.sum(y, axis=2, keepdims=True)                # (N, C_out, 1)
    ss_b = jnp.sum(y * y, axis=2, keepdims=True)           # (N, C_out, 1)
    s = s_b[0:1]
    ss = ss_b[0:1]
    for b in range(1, n):
        s = s + s_b[b:b + 1]
        ss = ss + ss_b[b:b + 1]

    inv_p = 1.0 / (n * _hw)
    mean = s * inv_p                                       # (1, C_out, 1)
    var = ss * inv_p - mean * mean                         # biased variance
    gb = gb_ref[...]                                       # (C_out, 2)
    gamma = gb[:, 0:1][None]                               # (1, C_out, 1)
    beta = gb[:, 1:2][None]
    scale = gamma * jax.lax.rsqrt(var + 1e-5)              # EUP rsqrt
    shift = beta - mean * scale
    o_ref[...] = (y * scale + shift).astype(o_ref.dtype)   # single full-tile FMA


def _relu_conv_bn_pallas(x_nchw, w, gb):
    """Run the fused ReLUConvBN kernel on an NCHW tensor (no transposes)."""
    N, Cin, H, W = x_nchw.shape
    Cout = w.shape[0]
    HW = H * W
    x3 = x_nchw.reshape(N, Cin, HW)          # free reshape (merge trailing dims)
    out3 = pl.pallas_call(
        relu_conv1x1_bn_kernel,
        out_shape=jax.ShapeDtypeStruct((N, Cout, HW), x_nchw.dtype),
        in_specs=[
            pl.BlockSpec((N, Cin, HW), lambda: (0, 0, 0)),
            pl.BlockSpec((Cout, Cin), lambda: (0, 0)),
            pl.BlockSpec((Cout, 2), lambda: (0, 0)),
        ],
        out_specs=pl.BlockSpec((N, Cout, HW), lambda: (0, 0, 0)),
    )(x3, w, gb)
    return out3.reshape(N, Cout, H, W)       # free reshape back


@jax.jit
def cell_forward_pallas(s0, s1, drop_prob, params):
    """Cell.forward(s0, s1, drop_prob) for the default (normal, non-reduction) cell.

    normal_concat = range(1) means the return value is exactly preprocess0(s0);
    the preprocess1 branch, the two Identity skip-connects, the add and
    drop_prob never reach the output, so only the live branch is computed.
    """
    del s1, drop_prob  # dead w.r.t. the module's return value (this genotype)
    return _relu_conv_bn_pallas(s0, params["w0"], params["gb0"])


def reference_cell_forward(s0, s1, drop_prob, params):
    """Pure-JAX reference that mirrors the full PyTorch Cell.forward."""
    del drop_prob  # unused by this genotype (skip_connect ops are Identity)

    def relu_conv_bn(x, w, gamma, beta):
        x = jnp.maximum(x, 0.0)
        y = jnp.einsum("oi,nihw->nohw", w, x,
                       precision=jax.lax.Precision.HIGHEST)
        mean = jnp.mean(y, axis=(0, 2, 3), keepdims=True)
        var = jnp.mean((y - mean) ** 2, axis=(0, 2, 3), keepdims=True)
        y = (y - mean) * jax.lax.rsqrt(var + 1e-5)
        return y * gamma.reshape(1, -1, 1, 1) + beta.reshape(1, -1, 1, 1)

    s0p = relu_conv_bn(s0, params["w0"], params["g0"], params["b0"])
    s1p = relu_conv_bn(s1, params["w1"], params["g1"], params["b1"])
    states = [s0p, s1p]
    # step 0: indices = (1, 0), both ops are IdentityModel (skip_connect, stride 1)
    h1, h2 = states[1], states[0]
    states.append(h1 + h2)
    concat = list(range(1))  # genotype.normal_concat
    return jnp.concatenate([states[i] for i in concat], axis=1)


if __name__ == "__main__":
    # Small shapes consistent with the module: batch=2, channels=4, spatial 16x16.
    N, C_pp, C_p, C, H, W = 2, 4, 4, 4, 16, 16

    key = jax.random.PRNGKey(0)
    k0, k1, kw0, kw1, kg0, kb0, kg1, kb1 = jax.random.split(key, 8)
    s0 = jax.random.normal(k0, (N, C_pp, H, W), dtype=jnp.float32)
    s1 = jax.random.normal(k1, (N, C_p, H, W), dtype=jnp.float32)

    # preprocess0: ReLUConvBN(C_prev_prev -> C), 1x1 conv (no bias) + BN affine
    w0 = jax.random.normal(kw0, (C, C_pp), dtype=jnp.float32) / np.sqrt(C_pp)
    g0 = 1.0 + 0.1 * jax.random.normal(kg0, (C,), dtype=jnp.float32)
    b0 = 0.01 * jax.random.normal(kb0, (C,), dtype=jnp.float32)

    params = {
        "w0": w0, "g0": g0, "b0": b0,
        # gamma/beta packed once at parameter-prep time -> single kernel operand
        "gb0": jnp.stack([g0, b0], axis=1),
        # preprocess1: ReLUConvBN(C_prev -> C) (dead w.r.t. the output; kept for
        # fidelity in the pure-JAX reference)
        "w1": jax.random.normal(kw1, (C, C_p), dtype=jnp.float32) / np.sqrt(C_p),
        "g1": 1.0 + 0.1 * jax.random.normal(kg1, (C,), dtype=jnp.float32),
        "b1": 0.01 * jax.random.normal(kb1, (C,), dtype=jnp.float32),
    }
    drop_prob = 0.0

    out = jax.block_until_ready(cell_forward_pallas(s0, s1, drop_prob, params))
    ref = jax.block_until_ready(reference_cell_forward(s0, s1, drop_prob, params))

    # NOTE: BatchNorm uses batch statistics (PyTorch module default train mode);
    # eval-mode running stats would need a different (affine-only) epilogue.
    np.testing.assert_allclose(np.asarray(out), np.asarray(ref),
                               rtol=1e-4, atol=1e-4)
    assert out.shape == (N, C, H, W)
    print("KERNEL_OK")
</pallas_src>

<mosaic_0001>
module attributes {stable_mosaic.version = 11 : i64} {
  func.func @relu_conv1x1_bn_kernel(%arg0: memref<2x4x256xf32, #tpu.memory_space<vmem>>, %arg1: memref<4x4xf32, #tpu.memory_space<vmem>>, %arg2: memref<4x2xf32, #tpu.memory_space<vmem>>, %arg3: memref<2x4x256xf32, #tpu.memory_space<vmem>>) attributes {dimension_semantics = [], scalar_prefetch = 0 : i64, scratch_operands = 0 : i64, tpu.core_type = #tpu.core_type<tc>} {
    %c0 = arith.constant 0 : index
    %c0_0 = arith.constant 0 : index
    %c0_1 = arith.constant 0 : index
    %0 = vector.load %arg0[%c0, %c0_0, %c0_1] : memref<2x4x256xf32, #tpu.memory_space<vmem>>, vector<2x4x256xf32>
    %cst = arith.constant 0.000000e+00 : f32
    %1 = vector.broadcast %cst : f32 to vector<2x4x256xf32>
    %2 = arith.maximumf %0, %1 : vector<2x4x256xf32>
    %c0_2 = arith.constant 0 : index
    %c0_3 = arith.constant 0 : index
    %3 = vector.load %arg1[%c0_2, %c0_3] : memref<4x4xf32, #tpu.memory_space<vmem>>, vector<4x4xf32>
    %4 = vector.extract_strided_slice %3 {offsets = [0, 0], sizes = [4, 1], strides = [1, 1]} : vector<4x4xf32> to vector<4x1xf32>
    %5 = vector.shape_cast %4 : vector<4x1xf32> to vector<1x4x1xf32>
    %6 = vector.extract_strided_slice %2 {offsets = [0, 0, 0], sizes = [2, 1, 256], strides = [1, 1, 1]} : vector<2x4x256xf32> to vector<2x1x256xf32>
    %7 = vector.broadcast %5 : vector<1x4x1xf32> to vector<2x4x256xf32>
    %8 = vector.broadcast %6 : vector<2x1x256xf32> to vector<2x4x256xf32>
    %9 = arith.mulf %7, %8 : vector<2x4x256xf32>
    %10 = vector.extract_strided_slice %3 {offsets = [0, 1], sizes = [4, 1], strides = [1, 1]} : vector<4x4xf32> to vector<4x1xf32>
    %11 = vector.shape_cast %10 : vector<4x1xf32> to vector<1x4x1xf32>
    %12 = vector.extract_strided_slice %2 {offsets = [0, 1, 0], sizes = [2, 1, 256], strides = [1, 1, 1]} : vector<2x4x256xf32> to vector<2x1x256xf32>
    %13 = vector.broadcast %11 : vector<1x4x1xf32> to vector<2x4x256xf32>
    %14 = vector.broadcast %12 : vector<2x1x256xf32> to vector<2x4x256xf32>
    %15 = arith.mulf %13, %14 : vector<2x4x256xf32>
    %16 = arith.addf %9, %15 : vector<2x4x256xf32>
    %17 = vector.extract_strided_slice %3 {offsets = [0, 2], sizes = [4, 1], strides = [1, 1]} : vector<4x4xf32> to vector<4x1xf32>
    %18 = vector.shape_cast %17 : vector<4x1xf32> to vector<1x4x1xf32>
    %19 = vector.extract_strided_slice %2 {offsets = [0, 2, 0], sizes = [2, 1, 256], strides = [1, 1, 1]} : vector<2x4x256xf32> to vector<2x1x256xf32>
    %20 = vector.broadcast %18 : vector<1x4x1xf32> to vector<2x4x256xf32>
    %21 = vector.broadcast %19 : vector<2x1x256xf32> to vector<2x4x256xf32>
    %22 = arith.mulf %20, %21 : vector<2x4x256xf32>
    %23 = arith.addf %16, %22 : vector<2x4x256xf32>
    %24 = vector.extract_strided_slice %3 {offsets = [0, 3], sizes = [4, 1], strides = [1, 1]} : vector<4x4xf32> to vector<4x1xf32>
    %25 = vector.shape_cast %24 : vector<4x1xf32> to vector<1x4x1xf32>
    %26 = vector.extract_strided_slice %2 {offsets = [0, 3, 0], sizes = [2, 1, 256], strides = [1, 1, 1]} : vector<2x4x256xf32> to vector<2x1x256xf32>
    %27 = vector.broadcast %25 : vector<1x4x1xf32> to vector<2x4x256xf32>
    %28 = vector.broadcast %26 : vector<2x1x256xf32> to vector<2x4x256xf32>
    %29 = arith.mulf %27, %28 : vector<2x4x256xf32>
    %30 = arith.addf %23, %29 : vector<2x4x256xf32>
    %cst_4 = arith.constant dense<0.000000e+00> : vector<2x4xf32>
    %31 = vector.multi_reduction <add>, %30, %cst_4 [2] : vector<2x4x256xf32> to vector<2x4xf32>
    %32 = vector.shape_cast %31 : vector<2x4xf32> to vector<2x4x1xf32>
    %33 = arith.mulf %30, %30 : vector<2x4x256xf32>
    %cst_5 = arith.constant dense<0.000000e+00> : vector<2x4xf32>
    %34 = vector.multi_reduction <add>, %33, %cst_5 [2] : vector<2x4x256xf32> to vector<2x4xf32>
    %35 = vector.shape_cast %34 : vector<2x4xf32> to vector<2x4x1xf32>
    %36 = vector.extract_strided_slice %32 {offsets = [0, 0, 0], sizes = [1, 4, 1], strides = [1, 1, 1]} : vector<2x4x1xf32> to vector<1x4x1xf32>
    %37 = vector.extract_strided_slice %35 {offsets = [0, 0, 0], sizes = [1, 4, 1], strides = [1, 1, 1]} : vector<2x4x1xf32> to vector<1x4x1xf32>
    %38 = vector.extract_strided_slice %32 {offsets = [1, 0, 0], sizes = [1, 4, 1], strides = [1, 1, 1]} : vector<2x4x1xf32> to vector<1x4x1xf32>
    %39 = arith.addf %36, %38 : vector<1x4x1xf32>
    %40 = vector.extract_strided_slice %35 {offsets = [1, 0, 0], sizes = [1, 4, 1], strides = [1, 1, 1]} : vector<2x4x1xf32> to vector<1x4x1xf32>
    %41 = arith.addf %37, %40 : vector<1x4x1xf32>
    %cst_6 = arith.constant 0.001953125 : f32
    %42 = vector.broadcast %cst_6 : f32 to vector<1x4x1xf32>
    %43 = arith.mulf %39, %42 : vector<1x4x1xf32>
    %cst_7 = arith.constant 0.001953125 : f32
    %44 = vector.broadcast %cst_7 : f32 to vector<1x4x1xf32>
    %45 = arith.mulf %41, %44 : vector<1x4x1xf32>
    %46 = arith.mulf %43, %43 : vector<1x4x1xf32>
    %47 = arith.subf %45, %46 : vector<1x4x1xf32>
    %c0_8 = arith.constant 0 : index
    %c0_9 = arith.constant 0 : index
    %48 = vector.load %arg2[%c0_8, %c0_9] : memref<4x2xf32, #tpu.memory_space<vmem>>, vector<4x2xf32>
    %49 = vector.extract_strided_slice %48 {offsets = [0, 0], sizes = [4, 1], strides = [1, 1]} : vector<4x2xf32> to vector<4x1xf32>
    %50 = vector.shape_cast %49 : vector<4x1xf32> to vector<1x4x1xf32>
    %51 = vector.extract_strided_slice %48 {offsets = [0, 1], sizes = [4, 1], strides = [1, 1]} : vector<4x2xf32> to vector<4x1xf32>
    %52 = vector.shape_cast %51 : vector<4x1xf32> to vector<1x4x1xf32>
    %cst_10 = arith.constant 9.99999974E-6 : f32
    %53 = vector.broadcast %cst_10 : f32 to vector<1x4x1xf32>
    %54 = arith.addf %47, %53 : vector<1x4x1xf32>
    %55 = math.rsqrt %54 : vector<1x4x1xf32>
    %56 = arith.mulf %50, %55 : vector<1x4x1xf32>
    %57 = arith.mulf %43, %56 : vector<1x4x1xf32>
    %58 = arith.subf %52, %57 : vector<1x4x1xf32>
    %59 = vector.broadcast %56 : vector<1x4x1xf32> to vector<2x4x256xf32>
    %60 = arith.mulf %30, %59 : vector<2x4x256xf32>
    %61 = vector.broadcast %58 : vector<1x4x1xf32> to vector<2x4x256xf32>
    %62 = arith.addf %60, %61 : vector<2x4x256xf32>
    %c0_11 = arith.constant 0 : index
    %c0_12 = arith.constant 0 : index
    %c0_13 = arith.constant 0 : index
    %63 = vector.load %arg3[%c0_11, %c0_12, %c0_13] : memref<2x4x256xf32, #tpu.memory_space<vmem>>, vector<2x4x256xf32>
    tpu.vector_store %arg3[%c0_11, %c0_12, %c0_13], %62 {strides = array<i32>} : memref<2x4x256xf32, #tpu.memory_space<vmem>>, vector<2x4x256xf32>,
    return
  }
}

</mosaic_0001>

<llo_original>
// kernel: cell_forward_pallas.1
$region0: #{cell_forward_pallas.1}
  #allocation0 [shape = 'u32[]', space=smem, size = 0x4, offset = 0x4, fixed_abs, tag = 'smem constant byte address 0x4 - core index']
  #allocation1 [shape = 'u32[144,128]{1,0:T(1,128)}', space=vmem, size = 0x12000, scoped, tag = 'internal scratch']
  %s0 = inlined_call_operand.vmem [shape: f32[2,4,256], index: 0, kind: input, shape index: {}]
  %s1 = inlined_call_operand.vmem [shape: f32[4,4], index: 1, kind: input, shape index: {}]
  %s2 = inlined_call_operand.vmem [shape: f32[4,2], index: 2, kind: input, shape index: {}]
  %s3 = inlined_call_operand.vmem [shape: f32[2,4,256], index: 3, kind: output, shape index: {}]
  %s4 = sld [smem:[#allocation0]]
  $region22: #{cell_forward_pallas.1} parent=0
    _
  %s6 = ssub.s32 1, %s4
  %s7 = scalar_select 0, %s6, %s4
  // Predicated region
  $region2: #{cell_forward_pallas.1} parent=0 // pred_check
    _
  $region3: #{cell_forward_pallas.1} parent=0 // pred_check_branch
    %9 = sbr.rel (0) target = $region5
  $region4: #{cell_forward_pallas.1} parent=0 // pred_region
    _
  $region5: #{cell_forward_pallas.1} parent=0 // pred_fallthru
    _
  // Predicated region
  $region6: #{cell_forward_pallas.1} parent=0 // pred_check
    _
  $region7: #{cell_forward_pallas.1} parent=0 // pred_check_branch
    %11 = sbr.rel (0) target = $region9
  $region8: #{cell_forward_pallas.1} parent=0 // pred_region
    _
  $region9: #{cell_forward_pallas.1} parent=0 // pred_fallthru
    _
  // Predicated region
  $region10: #{cell_forward_pallas.1} parent=0 // pred_check
    _
  $region11: #{cell_forward_pallas.1} parent=0 // pred_check_branch
    %13 = sbr.rel (0) target = $region13
  $region12: #{cell_forward_pallas.1} parent=0 // pred_region
    _
  $region13: #{cell_forward_pallas.1} parent=0 // pred_fallthru
    _
  %v14 = vld [vmem:[%s0] sm:$0xff]
  %v15 = vld [vmem:[%s0 + $0x8] sm:$0xff]
  %v16 = vmax.f32 %v14, 0.0
  %v17 = vmax.f32 %v15, 0.0
  %v18 = vld [vmem:[%s1] sm:$0xf]
  %20 = vset.pattern.permute.xlu0 0
  %21 = vperm.xlu0 %20, %v18
  %v22 = vpop.permute.xlu0 %21
  %v26 = vlaneseq
  %v27 = vshrl.u32 %v26, 7
  %v28 = vsub.s32 0, %v27
  %v29 = vrot.slane %v16, %v28
  %v30 = vlaneseq
  %v31 = vshrl.u32 %v30, 7
  %v32 = vsub.s32 4, %v31
  %v33 = vrot.slane %v16, %v32
  %v34 = vlaneseq
  %v35 = vshrl.u32 %v34, 7
  %v36 = vsub.s32 0, %v35
  %v37 = vrot.slane %v17, %v36
  %v38 = vlaneseq
  %v39 = vshrl.u32 %v38, 7
  %v40 = vsub.s32 4, %v39
  %v41 = vrot.slane %v17, %v40
  %v46 = vlaneseq
  %v47 = vshrl.u32 %v46, 7
  %v48 = vsub.s32 0, %v47
  %v49 = vrot.slane %v29, %v48
  %v50 = vlaneseq
  %v51 = vshrl.u32 %v50, 7
  %v52 = vsub.s32 0, %v51
  %v53 = vrot.slane %v33, %v52
  %v54 = vlaneseq
  %v55 = vshrl.u32 %v54, 7
  %v56 = vsub.s32 0, %v55
  %v57 = vrot.slane %v37, %v56
  %v58 = vlaneseq
  %v59 = vshrl.u32 %v58, 7
  %v60 = vsub.s32 0, %v59
  %v61 = vrot.slane %v41, %v60
  %v62 = vmul.f32 %v22, %v49
  %v63 = vmul.f32 %v22, %v53
  %v64 = vmul.f32 %v22, %v57
  %v65 = vmul.f32 %v22, %v61
  %66 = vset.pattern.permute.xlu0 1
  %67 = vperm.xlu0 %66, %v18
  %v68 = vpop.permute.xlu0 %67
  %v70 = vlaneseq
  %v71 = vshrl.u32 %v70, 7
  %v72 = vsub.s32 1, %v71
  %v73 = vrot.slane %v16, %v72
  %v74 = vlaneseq
  %v75 = vshrl.u32 %v74, 7
  %v76 = vsub.s32 5, %v75
  %v77 = vrot.slane %v16, %v76
  %v78 = vlaneseq
  %v79 = vshrl.u32 %v78, 7
  %v80 = vsub.s32 1, %v79
  %v81 = vrot.slane %v17, %v80
  %v82 = vlaneseq
  %v83 = vshrl.u32 %v82, 7
  %v84 = vsub.s32 5, %v83
  %v85 = vrot.slane %v17, %v84
  %v90 = vlaneseq
  %v91 = vshrl.u32 %v90, 7
  %v92 = vsub.s32 1, %v91
  %v93 = vrot.slane %v73, %v92
  %v94 = vlaneseq
  %v95 = vshrl.u32 %v94, 7
  %v96 = vsub.s32 1, %v95
  %v97 = vrot.slane %v77, %v96
  %v98 = vlaneseq
  %v99 = vshrl.u32 %v98, 7
  %v100 = vsub.s32 1, %v99
  %v101 = vrot.slane %v81, %v100
  %v102 = vlaneseq
  %v103 = vshrl.u32 %v102, 7
  %v104 = vsub.s32 1, %v103
  %v105 = vrot.slane %v85, %v104
  %v106 = vmul.f32 %v68, %v93
  %v107 = vmul.f32 %v68, %v97
  %v108 = vmul.f32 %v68, %v101
  %v109 = vmul.f32 %v68, %v105
  %v110 = vadd.f32 %v62, %v106
  %v111 = vadd.f32 %v63, %v107
  %v112 = vadd.f32 %v64, %v108
  %v113 = vadd.f32 %v65, %v109
  %114 = vset.pattern.permute.xlu0 2
  %115 = vperm.xlu0 %114, %v18
  %v116 = vpop.permute.xlu0 %115
  %v118 = vlaneseq
  %v119 = vshrl.u32 %v118, 7
  %v120 = vsub.s32 2, %v119
  %v121 = vrot.slane %v16, %v120
  %v122 = vlaneseq
  %v123 = vshrl.u32 %v122, 7
  %v124 = vsub.s32 6, %v123
  %v125 = vrot.slane %v16, %v124
  %v126 = vlaneseq
  %v127 = vshrl.u32 %v126, 7
  %v128 = vsub.s32 2, %v127
  %v129 = vrot.slane %v17, %v128
  %v130 = vlaneseq
  %v131 = vshrl.u32 %v130, 7
  %v132 = vsub.s32 6, %v131
  %v133 = vrot.slane %v17, %v132
  %v138 = vlaneseq
  %v139 = vshrl.u32 %v138, 7
  %v140 = vsub.s32 2, %v139
  %v141 = vrot.slane %v121, %v140
  %v142 = vlaneseq
  %v143 = vshrl.u32 %v142, 7
  %v144 = vsub.s32 2, %v143
  %v145 = vrot.slane %v125, %v144
  %v146 = vlaneseq
  %v147 = vshrl.u32 %v146, 7
  %v148 = vsub.s32 2, %v147
  %v149 = vrot.slane %v129, %v148
  %v150 = vlaneseq
  %v151 = vshrl.u32 %v150, 7
  %v152 = vsub.s32 2, %v151
  %v153 = vrot.slane %v133, %v152
  %v154 = vmul.f32 %v116, %v141
  %v155 = vmul.f32 %v116, %v145
  %v156 = vmul.f32 %v116, %v149
  %v157 = vmul.f32 %v116, %v153
  %v158 = vadd.f32 %v110, %v154
  %v159 = vadd.f32 %v111, %v155
  %v160 = vadd.f32 %v112, %v156
  %v161 = vadd.f32 %v113, %v157
  %162 = vset.pattern.permute.xlu0 3
  %163 = vperm.xlu0 %162, %v18
  %v164 = vpop.permute.xlu0 %163
  %v166 = vlaneseq
  %v167 = vshrl.u32 %v166, 7
  %v168 = vsub.s32 3, %v167
  %v169 = vrot.slane %v16, %v168
  %v170 = vlaneseq
  %v171 = vshrl.u32 %v170, 7
  %v172 = vsub.s32 7, %v171
  %v173 = vrot.slane %v16, %v172
  %v174 = vlaneseq
  %v175 = vshrl.u32 %v174, 7
  %v176 = vsub.s32 3, %v175
  %v177 = vrot.slane %v17, %v176
  %v178 = vlaneseq
  %v179 = vshrl.u32 %v178, 7
  %v180 = vsub.s32 7, %v179
  %v181 = vrot.slane %v17, %v180
  %v186 = vlaneseq
  %v187 = vshrl.u32 %v186, 7
  %v188 = vsub.s32 3, %v187
  %v189 = vrot.slane %v169, %v188
  %v190 = vlaneseq
  %v191 = vshrl.u32 %v190, 7
  %v192 = vsub.s32 3, %v191
  %v193 = vrot.slane %v173, %v192
  %v194 = vlaneseq
  %v195 = vshrl.u32 %v194, 7
  %v196 = vsub.s32 3, %v195
  %v197 = vrot.slane %v177, %v196
  %v198 = vlaneseq
  %v199 = vshrl.u32 %v198, 7
  %v200 = vsub.s32 3, %v199
  %v201 = vrot.slane %v181, %v200
  %v202 = vmul.f32 %v164, %v189
  %v203 = vmul.f32 %v164, %v193
  %v204 = vmul.f32 %v164, %v197
  %v205 = vmul.f32 %v164, %v201
  %v206 = vadd.f32 %v158, %v202
  %v207 = vadd.f32 %v159, %v203
  %v208 = vadd.f32 %v160, %v204
  %v209 = vadd.f32 %v161, %v205
  %vm210 = vcmask 1043456
  %v211 = vsel %vm210, %v206, 0.0
  %v212 = vsel %vm210, %v207, 0.0
  %v213 = vadd.f32 %v211, %v212
  %214 = vadd.xlane.f32.xlu0 %v213
  %v215 = vpop.xlane.xlu0 %214
  %v216 = vsel %vm210, %v208, 0.0
  %v217 = vsel %vm210, %v209, 0.0
  %v218 = vadd.f32 %v216, %v217
  %219 = vadd.xlane.f32.xlu0 %v218
  %v220 = vpop.xlane.xlu0 %219
  %v221 = vmul.f32 %v206, %v206
  %v222 = vmul.f32 %v207, %v207
  %v223 = vmul.f32 %v208, %v208
  %v224 = vmul.f32 %v209, %v209
  %v225 = vsel %vm210, %v221, 0.0
  %v226 = vsel %vm210, %v222, 0.0
  %v227 = vadd.f32 %v225, %v226
  %228 = vadd.xlane.f32.xlu0 %v227
  %v229 = vpop.xlane.xlu0 %228
  %v230 = vsel %vm210, %v223, 0.0
  %v231 = vsel %vm210, %v224, 0.0
  %v232 = vadd.f32 %v230, %v231
  %233 = vadd.xlane.f32.xlu0 %v232
  %v234 = vpop.xlane.xlu0 %233
  %v235 = vadd.f32 %v215, %v220
  %v236 = vadd.f32 %v229, %v234
  %v237 = vmul.f32 %v235, 0.001953125
  %v238 = vmul.f32 %v236, 0.001953125
  %v239 = vmul.f32 %v237, %v237
  %v240 = vsub.f32 %v238, %v239
  %v241 = vld [vmem:[%s2] sm:$0xf]
  %v242 = vadd.f32 %v240, 1e-05
  %v243 = vrsqrt.pop %v242
  %v244 = vmul.f32 %v241, %v243
  %v245 = vmul.f32 %v237, %v244
  %247 = vrot.lane.b32.xlu0 %v245, 1
  %v248 = vpop.permute.xlu0 %247
  %v250 = vsub.f32 %v241, %v248
  %252 = vset.pattern.permute.xlu0 0
  %253 = vperm.xlu0 %252, %v244
  %v254 = vpop.permute.xlu0 %253
  %v256 = vmul.f32 %v206, %v254
  %v257 = vmul.f32 %v207, %v254
  %v258 = vmul.f32 %v208, %v254
  %v259 = vmul.f32 %v209, %v254
  %261 = vset.pattern.permute.xlu0 1
  %262 = vperm.xlu0 %261, %v250
  %v263 = vpop.permute.xlu0 %262
  %v265 = vadd.f32 %v256, %v263
  %v266 = vadd.f32 %v257, %v263
  %v267 = vadd.f32 %v258, %v263
  %v268 = vadd.f32 %v259, %v263
  %v273 = vcombine.low %v265, %v266
  %v274 = vcombine.low %v267, %v268
  %277 = vst [vmem:[%s3] sm:$0xff] %v273
  %278 = vst [vmem:[%s3 + $0x8] sm:$0xff] %v274
  // Predicated region
  $region14: #{cell_forward_pallas.1} parent=0 // pred_check
    _
  $region15: #{cell_forward_pallas.1} parent=0 // pred_check_branch
    %280 = sbr.rel (0) target = $region17
  $region16: #{cell_forward_pallas.1} parent=0 // pred_region
    _
  $region17: #{cell_forward_pallas.1} parent=0 // pred_fallthru
    _
  // Predicated region
  $region18: #{cell_forward_pallas.1} parent=0 // pred_check
    _
  $region19: #{cell_forward_pallas.1} parent=0 // pred_check_branch
    %282 = sbr.rel (0) target = $region21
  $region20: #{cell_forward_pallas.1} parent=0 // pred_region
    _
  $region21: #{cell_forward_pallas.1} parent=0 // pred_fallthru
    _

</llo_original>
